<compile_context>
chip_gen: v5e
topology: v5e:2x2
jax: 0.10.0
libtpu: 0.0.40
codegen_flags: <defaults>
</compile_context>

<pallas_src>
import math

import jax
import jax.numpy as jnp
from jax.experimental import pallas as pl
from jax.experimental.pallas import tpu as pltpu

_INV_SQRT2 = 0.7071067811865476


def _gelu_exact_f32(b):
    return 0.5 * b * (1.0 + jax.lax.erf(b * _INV_SQRT2))


def _geglu_split_kernel(a_ref, b_ref, o_ref):
    # a_ref, b_ref, o_ref: (TR, TC) lane-aligned blocks.
    a = a_ref[...].astype(jnp.float32)
    b = b_ref[...].astype(jnp.float32)
    o_ref[...] = (a * _gelu_exact_f32(b)).astype(o_ref.dtype)


def _geglu_fused_kernel(x_ref, o_ref):
    # Cold-path fallback: x_ref (TR, 2H), o_ref (TR, H); split inside the kernel.
    h = o_ref.shape[-1]
    x = x_ref[...]
    a = x[:, :h].astype(jnp.float32)
    b = x[:, h:].astype(jnp.float32)
    o_ref[...] = (a * _gelu_exact_f32(b)).astype(o_ref.dtype)


def _round_up(v, m):
    return (v + m - 1) // m * m


def _vmem_capacity_bytes():
    try:
        return int(pltpu.get_tpu_info().vmem_capacity_bytes)
    except Exception:
        return 64 * 1024 * 1024  # conservative per-TC floor (v7x)


@jax.jit
def geglu(x):
    *lead, n = x.shape
    assert n % 2 == 0, "last dim must be even to split in half"
    half = n // 2
    rows = math.prod(lead) if lead else 1
    x2d = x.reshape(rows, n)

    itemsize = jnp.dtype(x.dtype).itemsize
    # Sublane packing granularity: 8 rows for 32-bit, 16 for bf16, 32 for int8.
    sub = 8 * max(1, 4 // itemsize)

    # Modest VMEM budget: tiles are small, double-buffering is all we need.
    phys_vmem = _vmem_capacity_bytes()
    vmem_limit = int(min(32 * 1024 * 1024, (phys_vmem * 3) // 4))

    if half % 128 == 0:
        # ---- hot path: lane-aligned halves via two BlockSpecs on the same array ----
        if half <= 2048:
            tc, gc = half, 1
        else:
            divs = [c for c in (2048, 1024, 512) if half % c == 0]
            if divs:
                tc = divs[0]
                gc = half // tc
            else:
                # No wide divisor: keep full half-width blocks (lane-dense, big DMA
                # bursts) and split rows harder instead of dropping to tc=128.
                tc, gc = half, 1

        # Row tile: target ~1 MiB per a/b/out I/O tile (>=85% of HBM roofline is
        # reached at >=512-lane blocks; giant tiles add nothing but VMEM pressure).
        target_tile_bytes = 1 << 20
        tr = max(sub, (target_tile_bytes // (tc * itemsize)) // sub * sub)
        tr = min(tr, 512)
        tr = min(tr, _round_up(rows, sub))

        # Guarantee several grid steps so v7x's two TensorCores both run
        # (mem-bound kernel: a 1-step grid halves effective HBM bandwidth).
        min_steps = 8
        while tr > sub and pl.cdiv(rows, tr) * gc < min_steps:
            tr = max(sub, (tr // 2) // sub * sub)

        grid = (pl.cdiv(rows, tr), gc)
        out2d = pl.pallas_call(
            _geglu_split_kernel,
            out_shape=jax.ShapeDtypeStruct((rows, half), x.dtype),
            grid_spec=pltpu.PrefetchScalarGridSpec(
                num_scalar_prefetch=0,
                grid=grid,
                in_specs=[
                    pl.BlockSpec((tr, tc), lambda i, j: (i, j)),               # a half
                    pl.BlockSpec((tr, tc), lambda i, j, _g=gc: (i, j + _g)),   # b half
                ],
                out_specs=pl.BlockSpec((tr, tc), lambda i, j: (i, j)),
            ),
            compiler_params=pltpu.CompilerParams(
                dimension_semantics=("parallel", "parallel"),
                vmem_limit_bytes=vmem_limit,
            ),
        )(x2d, x2d)
    else:
        # ---- cold path: non-128-aligned half; full 2H block, split in kernel ----
        # Lane-misaligned slice + (possibly) sub-128 output width -> masked stores.
        # Kept small and simple; fix alignment upstream for hot use.
        target_tile_bytes = 1 << 20
        tr = max(sub, (target_tile_bytes // (n * itemsize)) // sub * sub)
        tr = min(tr, 256)
        tr = min(tr, _round_up(rows, sub))
        min_steps = 8
        while tr > sub and pl.cdiv(rows, tr) < min_steps:
            tr = max(sub, (tr // 2) // sub * sub)

        grid = (pl.cdiv(rows, tr),)
        out2d = pl.pallas_call(
            _geglu_fused_kernel,
            out_shape=jax.ShapeDtypeStruct((rows, half), x.dtype),
            grid_spec=pltpu.PrefetchScalarGridSpec(
                num_scalar_prefetch=0,
                grid=grid,
                in_specs=[pl.BlockSpec((tr, n), lambda i: (i, 0))],
                out_specs=pl.BlockSpec((tr, half), lambda i: (i, 0)),
            ),
            compiler_params=pltpu.CompilerParams(
                dimension_semantics=("parallel",),
                vmem_limit_bytes=vmem_limit,
            ),
        )(x2d)

    return out2d.reshape(*lead, half)


def _geglu_ref(x):
    half = x.shape[-1] // 2
    a, b = x[..., :half], x[..., half:]
    g = jax.nn.gelu(b.astype(jnp.float32), approximate=False)
    return (a.astype(jnp.float32) * g).astype(x.dtype)


if __name__ == "__main__":
    key = jax.random.PRNGKey(0)
    k1, k2, k3, k4 = jax.random.split(key, 4)

    # Main case: 128-aligned half, even row count.
    x1 = jax.random.normal(k1, (2, 8, 256), dtype=jnp.float32)
    o1 = geglu(x1)
    jax.block_until_ready(o1)
    assert o1.shape == (2, 8, 128), o1.shape
    assert jnp.allclose(o1, _geglu_ref(x1), atol=1e-5, rtol=1e-5), "f32 mismatch"

    # Ragged row count (rows not a multiple of the row tile) — no pad/slice needed.
    x2 = jax.random.normal(k2, (3, 5, 256), dtype=jnp.float32)
    o2 = geglu(x2)
    jax.block_until_ready(o2)
    assert o2.shape == (3, 5, 128), o2.shape
    assert jnp.allclose(o2, _geglu_ref(x2), atol=1e-5, rtol=1e-5), "ragged mismatch"

    # Non-128-aligned half: exercises the full-width cold path.
    x3 = jax.random.normal(k3, (2, 8, 96), dtype=jnp.float32)
    o3 = geglu(x3)
    jax.block_until_ready(o3)
    assert o3.shape == (2, 8, 48), o3.shape
    assert jnp.allclose(o3, _geglu_ref(x3), atol=1e-5, rtol=1e-5), "fallback mismatch"

    # bf16 input: f32 internal math, bf16 store.
    x4 = jax.random.normal(k4, (4, 16, 512), dtype=jnp.bfloat16)
    o4 = geglu(x4)
    jax.block_until_ready(o4)
    assert o4.shape == (4, 16, 256), o4.shape
    assert jnp.allclose(
        o4.astype(jnp.float32), _geglu_ref(x4).astype(jnp.float32),
        atol=1e-2, rtol=1e-2,
    ), "bf16 mismatch"

    print("KERNEL_OK")
</pallas_src>

<mosaic_0001>
module attributes {stable_mosaic.version = 11 : i64} {
  func.func @_geglu_split_kernel(%arg0: i32, %arg1: i32, %arg2: memref<8x128xf32, #tpu.memory_space<vmem>>, %arg3: memref<8x128xf32, #tpu.memory_space<vmem>>, %arg4: memref<8x128xf32, #tpu.memory_space<vmem>>) attributes {dimension_semantics = [#tpu.dimension_semantics<parallel>, #tpu.dimension_semantics<parallel>], iteration_bounds = array<i64: 2, 1>, scalar_prefetch = 0 : i64, scratch_operands = 0 : i64, tpu.core_type = #tpu.core_type<tc>, window_params = [{transform_indices = @transform_0, window_bounds = array<i64: 8, 128>}, {transform_indices = @transform_1, window_bounds = array<i64: 8, 128>}, {transform_indices = @transform_2, window_bounds = array<i64: 8, 128>}]} {
    %c0 = arith.constant 0 : index
    %c0_0 = arith.constant 0 : index
    %0 = vector.load %arg2[%c0, %c0_0] : memref<8x128xf32, #tpu.memory_space<vmem>>, vector<8x128xf32>
    %c0_1 = arith.constant 0 : index
    %c0_2 = arith.constant 0 : index
    %1 = vector.load %arg3[%c0_1, %c0_2] : memref<8x128xf32, #tpu.memory_space<vmem>>, vector<8x128xf32>
    %cst = arith.constant 5.000000e-01 : f32
    %2 = vector.broadcast %cst : f32 to vector<8x128xf32>
    %3 = arith.mulf %2, %1 : vector<8x128xf32>
    %cst_3 = arith.constant 0.707106769 : f32
    %4 = vector.broadcast %cst_3 : f32 to vector<8x128xf32>
    %5 = arith.mulf %1, %4 : vector<8x128xf32>
    %6 = math.erf %5 : vector<8x128xf32>
    %cst_4 = arith.constant 1.000000e+00 : f32
    %7 = vector.broadcast %cst_4 : f32 to vector<8x128xf32>
    %8 = arith.addf %7, %6 : vector<8x128xf32>
    %9 = arith.mulf %3, %8 : vector<8x128xf32>
    %10 = arith.mulf %0, %9 : vector<8x128xf32>
    %c0_5 = arith.constant 0 : index
    %c0_6 = arith.constant 0 : index
    %11 = vector.load %arg4[%c0_5, %c0_6] : memref<8x128xf32, #tpu.memory_space<vmem>>, vector<8x128xf32>
    tpu.vector_store %arg4[%c0_5, %c0_6], %10 {strides = array<i32>} : memref<8x128xf32, #tpu.memory_space<vmem>>, vector<8x128xf32>,
    return
  }
  func.func @transform_0(%arg0: i32, %arg1: i32) -> (i32, i32) {
    %c0_i32 = arith.constant 0 : i32
    return %arg0, %arg1 : i32, i32
  }
  func.func @transform_1(%arg0: i32, %arg1: i32) -> (i32, i32) {
    %c1_i32 = arith.constant 1 : i32
    %0 = arith.addi %arg1, %c1_i32 : i32
    %c0_i32 = arith.constant 0 : i32
    return %arg0, %0 : i32, i32
  }
  func.func @transform_2(%arg0: i32, %arg1: i32) -> (i32, i32) {
    %c0_i32 = arith.constant 0 : i32
    return %arg0, %arg1 : i32, i32
  }
}

</mosaic_0001>

<llo_original>
// kernel: geglu.1
$region0: #{geglu.1}
  #allocation0 [shape = 'u32[]', space=smem, size = 0x4, offset = 0x4, fixed_abs, tag = 'smem constant byte address 0x4 - core index']
  #allocation1 [shape = 'u32[72,128]{1,0:T(1,128)}', space=vmem, size = 0x9000, scoped, tag = 'internal scratch']
  %s0 = inlined_call_operand.hbm [shape: f32[16,256], index: 0, kind: input, shape index: {}, may-alias: {0,1}]
  %s1 = inlined_call_operand.hbm [shape: f32[16,256], index: 1, kind: input, shape index: {}, may-alias: {0,1}]
  %s2 = inlined_call_operand.hbm [shape: f32[16,128], index: 2, kind: output, shape index: {}]
  %s3 = sld [smem:[#allocation0]]
  $region49: #{geglu.1} parent=0
    _
  %s5 = ssub.s32 1, %s3
  %s6 = scalar_select 0, %s5, %s3
  $region1: #{geglu.1} parent=0
    #allocation2 [shape = 'u8[8192]{0}', space=vmem, size = 0x2000, scoped, tag = 'input window, operand 0']
    #allocation3 [shape = 's32[2]{0}', space=sflag, size = 0x8, scoped, tag = 'scoped memory for geglu.1']
    #allocation4 [shape = 's32[2]{0}', space=sflag, size = 0x8, scoped, tag = 'scoped memory for geglu.1']
    #allocation5 [shape = 'u8[8192]{0}', space=vmem, size = 0x2000, scoped, tag = 'input window, operand 1']
    #allocation6 [shape = 's32[2]{0}', space=sflag, size = 0x8, scoped, tag = 'scoped memory for geglu.1']
    #allocation7 [shape = 'u8[8192]{0}', space=vmem, size = 0x2000, scoped, tag = 'output window, operand 0']
    %7 = vsyncpa [#allocation3], 0
    %s8 = scalar_lea.sflag [#allocation3], 1
    %9 = vsyncpa %s8, 0
    %10 = vsyncpa [#allocation6], 0
    %s11 = scalar_lea.sflag [#allocation6], 1
    %12 = vsyncpa %s11, 0
    %13 = vsyncpa [#allocation4], 0
    %s14 = scalar_lea.sflag [#allocation4], 1
    %15 = vsyncpa %s14, 0
    loop: start=0, step=1, limit=4
    $region2: #{geglu.1} parent=1 // loop_pre_header
      _
    $region3: #{geglu.1} parent=1 // loop_header
      %s17 = sphi 0, %s21
      %p18 = scmp.ge.s32.totalorder %s17, 4
      %s24 = sphi 0, %s36
      %s25 = sphi 0, %s32
      %s26 = sphi 0, %s24
      %s27 = sphi 0, %s25
      %s28 = sphi 0, %s26
      %s29 = sphi 0, %s27
      %s41 = sphi 0, %s43
      %s44 = sphi 0, %s41
      %s45 = sphi 0, %s44
      %s61 = sphi 0, %s45
      %s71 = sphi 0, %s73
      %s74 = sphi 0, %s71
      %s75 = sphi 0, %s74
      %s91 = sphi 0, %s75
      %s99 = sphi 0, %s101
      %s102 = sphi 0, %s99
      %s103 = sphi 0, %s102
      %s119 = sphi 0, %s103
    $region4: #{geglu.1} parent=1 // loop_header_branch
      %20 = sbr.rel (%p18) target = $region8
    $region5: #{geglu.1} parent=1 // loop_body
      %s22 = ssub.s32 %s17, 1
      %s23 = ssub.s32 %s17, 2
      %s30 = sadd.s32 1, %s25
      %p31 = scmp.ge.s32.totalorder %s30, 1
      %s32 = scalar_select %p31, 0, %s30
      %s33 = sadd.s32 1, %s24
      %s34 = scalar_select %p31, %s33, %s24
      %p35 = scmp.ge.s32.totalorder %s34, 2
      %s36 = scalar_select %p35, 0, %s34
      %s37 = ssub.s32 %s24, %s36
      %s38 = ssub.s32 %s25, %s32
      %s39 = sor.u32 %s37, %s38
      %p40 = scmp.eq.s32.totalorder %s39, 0
      %s42 = sadd.s32 %s41, 1
      %s43 = scalar_select %p40, %s41, %s42
      %p46 = pneg %p40
      %p47 = scmp.eq.s32.totalorder %s17, 1
      %p48 = por %p46, %p47
      %p49 = scmp.ne.s32.totalorder %s41, %s44
      %p50 = scmp.eq.s32.totalorder %s17, 0
      %p51 = por %p49, %p50
      %p52 = scmp.ne.s32.totalorder %s41, %s44
      %p53 = scmp.eq.s32.totalorder %s22, 1
      %p54 = por %p52, %p53
      %p55 = scmp.ne.s32.totalorder %s44, %s45
      %p56 = scmp.eq.s32.totalorder %s22, 0
      %p57 = por %p55, %p56
      %p58 = scmp.ne.s32.totalorder %s44, %s45
      %p59 = scmp.eq.s32.totalorder %s23, 1
      %p60 = por %p58, %p59
      %p62 = scmp.ne.s32.totalorder %s45, %s61
      %p63 = scmp.eq.s32.totalorder %s23, 0
      %p64 = por %p62, %p63
      %s65 = sadd.s32 %s25, 1
      %s66 = sadd.s32 %s32, 1
      %s67 = ssub.s32 %s24, %s36
      %s68 = ssub.s32 %s65, %s66
      %s69 = sor.u32 %s67, %s68
      %p70 = scmp.eq.s32.totalorder %s69, 0
      %s72 = sadd.s32 %s71, 1
      %s73 = scalar_select %p70, %s71, %s72
      %p76 = pneg %p70
      %p77 = scmp.eq.s32.totalorder %s17, 1
      %p78 = por %p76, %p77
      %p79 = scmp.ne.s32.totalorder %s71, %s74
      %p80 = scmp.eq.s32.totalorder %s17, 0
      %p81 = por %p79, %p80
      %p82 = scmp.ne.s32.totalorder %s71, %s74
      %p83 = scmp.eq.s32.totalorder %s22, 1
      %p84 = por %p82, %p83
      %p85 = scmp.ne.s32.totalorder %s74, %s75
      %p86 = scmp.eq.s32.totalorder %s22, 0
      %p87 = por %p85, %p86
      %p88 = scmp.ne.s32.totalorder %s74, %s75
      %p89 = scmp.eq.s32.totalorder %s23, 1
      %p90 = por %p88, %p89
      %p92 = scmp.ne.s32.totalorder %s75, %s91
      %p93 = scmp.eq.s32.totalorder %s23, 0
      %p94 = por %p92, %p93
      %s95 = ssub.s32 %s24, %s36
      %s96 = ssub.s32 %s25, %s32
      %s97 = sor.u32 %s95, %s96
      %p98 = scmp.eq.s32.totalorder %s97, 0
      %s100 = sadd.s32 %s99, 1
      %s101 = scalar_select %p98, %s99, %s100
      %p104 = pneg %p98
      %p105 = scmp.eq.s32.totalorder %s17, 1
      %p106 = por %p104, %p105
      %p107 = scmp.ne.s32.totalorder %s99, %s102
      %p108 = scmp.eq.s32.totalorder %s17, 0
      %p109 = por %p107, %p108
      %p110 = scmp.ne.s32.totalorder %s99, %s102
      %p111 = scmp.eq.s32.totalorder %s22, 1
      %p112 = por %p110, %p111
      %p113 = scmp.ne.s32.totalorder %s102, %s103
      %p114 = scmp.eq.s32.totalorder %s22, 0
      %p115 = por %p113, %p114
      %p116 = scmp.ne.s32.totalorder %s102, %s103
      %p117 = scmp.eq.s32.totalorder %s23, 1
      %p118 = por %p116, %p117
      %p120 = scmp.ne.s32.totalorder %s103, %s119
      %p121 = scmp.eq.s32.totalorder %s23, 0
      %p122 = por %p120, %p121
      %p123 = scmp.le.s32.totalorder 1, %s17
      %p124 = scmp.lt.s32.totalorder %s17, 3
      %p125 = pnand %p123, %p124
      %p126 = pneg %p125
      // Predicated region
      $region9: #{geglu.1} parent=5 // pred_check
        _
      $region10: #{geglu.1} parent=5 // pred_check_branch
        %128 = sbr.rel (%p125) target = $region12
      $region11: #{geglu.1} parent=5 // pred_region
        %s129 = ssub.s32 %s17, 1
      $region12: #{geglu.1} parent=5 // pred_fallthru
        _
      %p130 = scmp.lt.s32.totalorder %s17, 2
      // Predicated region
      $region13: #{geglu.1} parent=5 // pred_check
        %p131 = pneg %p130
      $region14: #{geglu.1} parent=5 // pred_check_branch
        %133 = sbr.rel (%p131) target = $region16
      $region15: #{geglu.1} parent=5 // pred_region
        // Predicated region
        $region17: #{geglu.1} parent=15 // pred_check
          %p134 = pneg %p51
        $region18: #{geglu.1} parent=15 // pred_check_branch
          %136 = sbr.rel (%p134) target = $region20
        $region19: #{geglu.1} parent=15 // pred_region
          %s137 = sand.u32 %s41, 1
          %s138 = scalar_lea.sflag [#allocation3], %s137
          %s139 = sand.u32 %s41, 1
          %s140 = smul.addr %s139, 8
          %s141 = scalar_lea.vmem [#allocation2], %s140
          %143 = vsyncadd %s138, 0
          %s144 = smul.addr %s24, 2
          %s145 = sadd.s32 %s25, %s144
          %s146 = smul.addr %s145, 8
          %s147 = scalar_lea.hbm %s0, %s146
          %s149 = sshll.u32 %s147, 4
          %s150 = int_to_ptr.hbm [resolvable:$true] %s149
          %s151 = sshll.u32 %s141, 4
          %s152 = int_to_ptr.vmem [resolvable:$true] %s151
          %154 = dma.hbm_to_vmem [thread:$0]  %s150, 128, %s152, %s138
        $region20: #{geglu.1} parent=15 // pred_fallthru
          _
        // Predicated region
        $region21: #{geglu.1} parent=15 // pred_check
          %p155 = pneg %p81
        $region22: #{geglu.1} parent=15 // pred_check_branch
          %157 = sbr.rel (%p155) target = $region24
        $region23: #{geglu.1} parent=15 // pred_region
          %s158 = sand.u32 %s71, 1
          %s159 = scalar_lea.sflag [#allocation6], %s158
          %s160 = sand.u32 %s71, 1
          %s161 = smul.addr %s160, 8
          %s162 = scalar_lea.vmem [#allocation5], %s161
          %s163 = sadd.s32 %s25, 1
          %165 = vsyncadd %s159, 0
          %s166 = smul.addr %s24, 2
          %s167 = sadd.s32 %s163, %s166
          %s168 = smul.addr %s167, 8
          %s169 = scalar_lea.hbm %s1, %s168
          %s171 = sshll.u32 %s169, 4
          %s172 = int_to_ptr.hbm [resolvable:$true] %s171
          %s173 = sshll.u32 %s162, 4
          %s174 = int_to_ptr.vmem [resolvable:$true] %s173
          %176 = dma.hbm_to_vmem [thread:$0]  %s172, 128, %s174, %s159
        $region24: #{geglu.1} parent=15 // pred_fallthru
          _
      $region16: #{geglu.1} parent=5 // pred_fallthru
        _
      %p177 = scmp.le.s32.totalorder 1, %s17
      %p178 = scmp.lt.s32.totalorder %s17, 3
      %p179 = pnand %p177, %p178
      %p180 = pneg %p179
      // Predicated region
      $region25: #{geglu.1} parent=5 // pred_check
        _
      $region26: #{geglu.1} parent=5 // pred_check_branch
        %182 = sbr.rel (%p179) target = $region28
      $region27: #{geglu.1} parent=5 // pred_region
        %s183 = ssub.s32 %s17, 1
        %s184 = sand.u32 %s44, 1
        %s185 = scalar_lea.sflag [#allocation3], %s184
        %s186 = sand.u32 %s44, 1
        %s187 = smul.addr %s186, 8
        %s188 = scalar_lea.vmem [#allocation2], %s187
        // Predicated region
        $region29: #{geglu.1} parent=27 // pred_check
          %p189 = pneg %p57
        $region30: #{geglu.1} parent=27 // pred_check_branch
          %191 = sbr.rel (%p189) target = $region32
        $region31: #{geglu.1} parent=27 // pred_region
          %193 = dma.done %s185, 128
        $region32: #{geglu.1} parent=27 // pred_fallthru
          _
        %s194 = sand.u32 %s74, 1
        %s195 = scalar_lea.sflag [#allocation6], %s194
        %s196 = sand.u32 %s74, 1
        %s197 = smul.addr %s196, 8
        %s198 = scalar_lea.vmem [#allocation5], %s197
        // Predicated region
        $region33: #{geglu.1} parent=27 // pred_check
          %p199 = pneg %p87
        $region34: #{geglu.1} parent=27 // pred_check_branch
          %201 = sbr.rel (%p199) target = $region36
        $region35: #{geglu.1} parent=27 // pred_region
          %203 = dma.done %s195, 128
        $region36: #{geglu.1} parent=27 // pred_fallthru
          _
        %s204 = sand.u32 %s44, 1
        %s205 = scalar_lea.sflag [#allocation3], %s204
        %s206 = sand.u32 %s44, 1
        %s207 = smul.addr %s206, 8
        %s208 = scalar_lea.vmem [#allocation2], %s207
        %p209 = pneg %p57
        %p210 = pneg %p54
        %s211 = sand.u32 %s74, 1
        %s212 = scalar_lea.sflag [#allocation6], %s211
        %s213 = sand.u32 %s74, 1
        %s214 = smul.addr %s213, 8
        %s215 = scalar_lea.vmem [#allocation5], %s214
        %p216 = pneg %p87
        %p217 = pneg %p84
        %p218 = pneg %p115
        %p219 = pneg %p112
        %s220 = sand.u32 %s102, 1
        %s221 = scalar_lea.sflag [#allocation4], %s220
        %s222 = sand.u32 %s102, 1
        %s223 = smul.addr %s222, 8
        %s224 = scalar_lea.vmem [#allocation7], %s223
        %s225 = sadd.s32 %s27, 1
        %v226 = vld [vmem:[%s188] sm:$0xff]
        %v227 = vld [vmem:[%s198] sm:$0xff]
        %v228 = vmul.f32 %v227, 0.5
        %v229 = vmul.f32 %v227, 0.70710677
        %v230 = vmul.f32 %v229, %v229
        %v231 = vmin.f32 16.0, %v230
        %v232 = vmul.f32 %v231, 2.1237322e-06
        %v233 = vadd.f32 %v232, 0.00028619796
        %v234 = vmul.f32 %v231, %v233
        %v235 = vadd.f32 %v234, 0.0036580483
        %v236 = vmul.f32 %v231, %v235
        %v237 = vadd.f32 %v236, 0.05243302
        %v238 = vmul.f32 %v231, %v237
        %v239 = vadd.f32 %v238, 0.18741608
        %v240 = vmul.f32 %v231, %v239
        %v241 = vadd.f32 %v240, 1.1283791
        %v242 = vmul.f32 %v229, %v241
        %v243 = vmul.f32 %v231, 3.8918573e-05
        %v244 = vadd.f32 %v243, 0.001143296
        %v245 = vmul.f32 %v231, %v244
        %v246 = vadd.f32 %v245, 0.014752088
        %v247 = vmul.f32 %v231, %v246
        %v248 = vadd.f32 %v247, 0.112945676
        %v249 = vmul.f32 %v231, %v248
        %v250 = vadd.f32 %v249, 0.4994258
        %v251 = vmul.f32 %v231, %v250
        %v252 = vadd.f32 %v251, 1.0
        %v253 = vrcp.pop %v252
        %v254 = vmul.f32 %v252, %v253
        %v255 = vsub.f32 1.0, %v254
        %v256 = vmul.f32 %v253, %v255
        %v257 = vadd.f32 %v253, %v256
        %vm258 = vweird.f32 %v252
        %vm259 = vweird.f32 %v253
        %vm260 = vmor %vm258, %vm259
        %v261 = vsel %vm260, %v253, %v257
        %v262 = vand.u32 2147483647, %v252
        %vm263 = vcmp.eq.f32.partialorder %v262, 8.507059e+37
        %v264 = vand.u32 %v252, 2147483648
        %v265 = vor.u32 1.1754944e-38, %v264
        %v266 = vsel %vm263, %v265, %v261
        %v267 = vmul.f32 %v242, %v266
        %v268 = vmin.f32 %v267, 1.0
        %v269 = vmax.f32 %v268, -1.0
        %v270 = vadd.f32 %v269, 1.0
        %v271 = vmul.f32 %v228, %v270
        %v272 = vmul.f32 %v226, %v271
        %273 = vst [vmem:[%s224] sm:$0xff] %v272
        %s274 = sand.u32 %s102, 1
        %s275 = scalar_lea.sflag [#allocation4], %s274
        %s276 = sand.u32 %s102, 1
        %s277 = smul.addr %s276, 8
        %s278 = scalar_lea.vmem [#allocation7], %s277
        // Predicated region
        $region37: #{geglu.1} parent=27 // pred_check
          %p279 = pneg %p112
        $region38: #{geglu.1} parent=27 // pred_check_branch
          %281 = sbr.rel (%p279) target = $region40
        $region39: #{geglu.1} parent=27 // pred_region
          %283 = vsyncadd %s275, 0
          %s284 = sadd.s32 %s27, %s26
          %s285 = smul.addr %s284, 8
          %s286 = scalar_lea.hbm %s2, %s285
          %s288 = sshll.u32 %s278, 4
          %s289 = int_to_ptr.vmem [resolvable:$true] %s288
          %s290 = sshll.u32 %s286, 4
          %s291 = int_to_ptr.hbm [resolvable:$true] %s290
          %293 = dma.vmem_to_hbm [thread:$0]  %s289, 128, %s291, %s275
        $region40: #{geglu.1} parent=27 // pred_fallthru
          _
      $region28: #{geglu.1} parent=5 // pred_fallthru
        _
      %p294 = scmp.le.s32.totalorder 2, %s17
      // Predicated region
      $region41: #{geglu.1} parent=5 // pred_check
        %p295 = pneg %p294
      $region42: #{geglu.1} parent=5 // pred_check_branch
        %297 = sbr.rel (%p295) target = $region44
      $region43: #{geglu.1} parent=5 // pred_region
        %s298 = ssub.s32 %s17, 2
        // Predicated region
        $region45: #{geglu.1} parent=43 // pred_check
          %p299 = pneg %p118
        $region46: #{geglu.1} parent=43 // pred_check_branch
          %301 = sbr.rel (%p299) target = $region48
        $region47: #{geglu.1} parent=43 // pred_region
          %s302 = sand.u32 %s103, 1
          %s303 = scalar_lea.sflag [#allocation4], %s302
          %s304 = sand.u32 %s103, 1
          %s305 = smul.addr %s304, 8
          %s306 = scalar_lea.vmem [#allocation7], %s305
          %308 = dma.done %s303, 128
        $region48: #{geglu.1} parent=43 // pred_fallthru
          _
      $region44: #{geglu.1} parent=5 // pred_fallthru
        _
    $region6: #{geglu.1} parent=1 // loop_footer
      %s21 = sadd.s32 1, %s17
    $region7: #{geglu.1} parent=1 // loop_footer_branch
      %16 = sbr.rel target = $region3
    $region8: #{geglu.1} parent=1 // loop_exit
      _
    %309 = vsyncpa [#allocation3], 1
    %s310 = scalar_lea.sflag [#allocation3], 1
    %311 = vsyncpa %s310, 1
    %312 = vsyncpa [#allocation6], 1
    %s313 = scalar_lea.sflag [#allocation6], 1
    %314 = vsyncpa %s313, 1
    %315 = vsyncpa [#allocation4], 1
    %s316 = scalar_lea.sflag [#allocation4], 1
    %317 = vsyncpa %s316, 1

</llo_original>
